<compile_context>
chip_gen: v5e
topology: v5e:2x2
jax: 0.10.0
libtpu: 0.0.40
codegen_flags: <defaults>
</compile_context>

<pallas_src>
import functools

import jax
import jax.numpy as jnp
from jax.experimental import pallas as pl
from jax.experimental.pallas import tpu as pltpu


def _round_up(n, m):
    return ((n + m - 1) // m) * m


def _vmem_budget(tb, D, L, out_itemsize):
    """Bytes of VMEM the kernel actually needs for a (tb, D) tile."""
    return (2 * tb * D * 4              # x tiles (f32), double-buffered
            + 2 * tb * D * out_itemsize  # out tiles, double-buffered
            + L * D * D * 2              # bf16 weights, one resident copy
            + L * D * 4                  # f32 biases
            + tb * D * (4 + 2))          # in-kernel intermediates: f32 acc + bf16 h


def _vmem_limit_bytes(budget):
    """Generation-aware VMEM limit: headroom below physical, never pinned to it."""
    phys = 64 * 1024 * 1024              # conservative fallback (v7x per-TC VMEM)
    try:
        phys = int(getattr(pltpu.get_tpu_info(), "vmem_capacity_bytes", phys))
    except Exception:
        pass
    cap = min(phys - 8 * 1024 * 1024, 100 * 1024 * 1024)   # 56 MiB v7x, 100 MiB v5e/v6e
    want = int(budget * 1.5) + 4 * 1024 * 1024
    return max(min(want, cap), min(32 * 1024 * 1024, cap))


def _choose_tb(B, D, L, out_itemsize, vmem_cap):
    """Pick a batch tile: as large as VMEM allows, dividing B (no pad pass),
    with >= 4 grid steps preferred (>= 2 per v7x TensorCore under "parallel")."""
    def fits(tb):
        return _vmem_budget(tb, D, L, out_itemsize) * 1.5 <= vmem_cap

    cands = [c for c in (2048, 1024, 512, 256, 128) if c <= B and fits(c)]
    for c in cands:                       # no padding, >= 2 steps per v7x TC
        if B % c == 0 and B // c >= 4:
            return c
    for c in cands:                       # no padding, >= 2 grid steps
        if B % c == 0 and B // c >= 2:
            return c
    for c in cands:                       # ragged: accept a pad fallback
        if B // c >= 2:
            return c
    # Tiny batches: split into (up to) two small tiles, rows rounded to sublane.
    return min(128, max(8, _round_up((B + 1) // 2, 8)))


def _fcnn_kernel(x_ref, w_ref, b_ref, o_ref, *, n_layers):
    # x_ref: (tb, D) f32 tile; w_ref: (L, D, D) bf16 resident in VMEM;
    # b_ref: (L, D) f32 resident in VMEM; o_ref: (tb, D) tile (f32 or bf16).
    h = x_ref[...].astype(jnp.bfloat16)                  # in-kernel cast (VPU filler)
    for l in range(n_layers):
        acc = jnp.dot(h, w_ref[l], preferred_element_type=jnp.float32)
        acc = acc + b_ref[l:l + 1, :]                    # (1, D) broadcast bias
        if l < n_layers - 1:
            # ReLU in f32, then bf16 re-cast of the next MXU LHS.
            # Dropout(0.1) is a no-op in eval mode.
            h = jnp.maximum(acc, 0.0).astype(jnp.bfloat16)
        else:
            o_ref[...] = acc.astype(o_ref.dtype)


def prepare_params(params):
    """One-time glue, outside the hot path: torch (out,in) -> (in,out),
    stack the 5 layers, cast weights to bf16 (halves weight HBM traffic)."""
    Wst = jnp.stack([W.T for (W, _) in params]).astype(jnp.bfloat16)   # (L, D, D)
    bst = jnp.stack([b for (_, b) in params]).astype(jnp.float32)      # (L, D)
    return Wst, bst


def fcnn_forward(x, prepared_params, *, tb=None, out_dtype=jnp.float32,
                 training=False):
    """x: (B, D) float32.  prepared_params: output of prepare_params()."""
    assert not training, "TODO(synk): training-mode dropout not implemented (eval only)"
    Wst, bst = prepared_params
    n_layers, D, _ = Wst.shape
    B, Dx = x.shape
    assert Dx == D
    assert D % 128 == 0, "pad the feature dim to a multiple of 128 (lane-dense)"
    # Note: D < 256 under-fills the v6e/v7x 256-wide MXU; production should use
    # the module default D=512 (or another 256-multiple).

    out_itemsize = jnp.dtype(out_dtype).itemsize
    vmem_cap = _vmem_limit_bytes(0) if False else None  # placeholder (cap computed below)
    # Compute the chip-aware cap once, then pick a tile that fits under it.
    phys_cap = _vmem_limit_bytes(_vmem_budget(128, D, n_layers, out_itemsize))
    if tb is None:
        tb = _choose_tb(B, D, n_layers, out_itemsize, phys_cap)

    Bp = _round_up(B, tb)
    xin = x
    if Bp != B:
        # Fallback only for ragged batches no candidate tile divides.
        xin = jnp.pad(x, ((0, Bp - B), (0, 0)))
    grid = (Bp // tb,)

    budget = _vmem_budget(tb, D, n_layers, out_itemsize)
    vmem_limit = _vmem_limit_bytes(budget)

    bytes_accessed = (Bp * D * 4            # x read (f32)
                      + Bp * D * out_itemsize  # out write
                      + Wst.size * 2        # bf16 weights
                      + bst.size * 4)       # f32 biases

    out = pl.pallas_call(
        functools.partial(_fcnn_kernel, n_layers=n_layers),
        out_shape=jax.ShapeDtypeStruct((Bp, D), out_dtype),
        grid_spec=pltpu.PrefetchScalarGridSpec(
            num_scalar_prefetch=0,
            grid=grid,
            in_specs=[
                # Activations: pipelined (double-buffered) f32 batch tiles.
                pl.BlockSpec((tb, D), lambda i: (i, 0)),
                # Weights / biases: grid-invariant, whole array resident in
                # VMEM once (no per-step DMA, no double buffering).
                pl.BlockSpec(memory_space=pltpu.MemorySpace.VMEM),
                pl.BlockSpec(memory_space=pltpu.MemorySpace.VMEM),
            ],
            out_specs=pl.BlockSpec((tb, D), lambda i: (i, 0)),
        ),
        compiler_params=pltpu.CompilerParams(
            dimension_semantics=("parallel",),   # shard batch tiles across v7x TCs
            vmem_limit_bytes=vmem_limit,
        ),
        cost_estimate=pl.CostEstimate(
            flops=2 * n_layers * Bp * D * D,
            transcendentals=0,
            bytes_accessed=bytes_accessed,
        ),
    )(xin, Wst, bst)

    if Bp != B:
        out = out[:B]
    # forward() ends with x.view(x.shape[0], -1); identity for 2-D input.
    return out.reshape(B, -1)


def init_params(key, data_num, n_layers=5):
    """Deterministic init mimicking torch.nn.Linear (uniform +/- 1/sqrt(fan_in))."""
    params = []
    bound = 1.0 / jnp.sqrt(data_num)
    for _ in range(n_layers):
        kw, kb, key = jax.random.split(key, 3)
        W = jax.random.uniform(kw, (data_num, data_num), jnp.float32, -bound, bound)
        b = jax.random.uniform(kb, (data_num,), jnp.float32, -bound, bound)
        params.append((W, b))
    return params


def fcnn_reference(x, params):
    h = x
    for i, (W, b) in enumerate(params):
        h = h @ W.T + b
        if i < len(params) - 1:
            h = jnp.maximum(h, 0.0)
    return h.reshape(h.shape[0], -1)


if __name__ == "__main__":
    data_num = 128   # small lane-aligned stand-in for the module's default 512
    batch = 512      # divisible by the 128-row tile -> 4 grid steps, no pad pass

    key = jax.random.PRNGKey(0)
    kx, kp = jax.random.split(key)
    x = jax.random.normal(kx, (batch, data_num), jnp.float32)
    params = init_params(kp, data_num)
    prepared = prepare_params(params)          # one-time, outside the hot path

    out = jax.block_until_ready(fcnn_forward(x, prepared))
    ref = fcnn_reference(x, params)

    assert out.shape == (batch, data_num)
    # bf16 MXU inputs with f32 accumulation over 5 chained layers -> loosen
    # the tolerance vs. the pure-fp32 reference.
    max_err = float(jnp.max(jnp.abs(out - ref)))
    assert jnp.allclose(out, ref, atol=5e-2, rtol=5e-2), f"max abs err {max_err}"

    print("KERNEL_OK")
</pallas_src>

<mosaic_0001>
module attributes {stable_mosaic.version = 11 : i64} {
  func.func @_fcnn_kernel(%arg0: i32, %arg1: memref<128x128xf32, #tpu.memory_space<vmem>>, %arg2: memref<5x128x128xbf16, #tpu.memory_space<vmem>>, %arg3: memref<5x128xf32, #tpu.memory_space<vmem>>, %arg4: memref<128x128xf32, #tpu.memory_space<vmem>>) attributes {dimension_semantics = [#tpu.dimension_semantics<parallel>], iteration_bounds = array<i64: 4>, scalar_prefetch = 0 : i64, scratch_operands = 0 : i64, tpu.core_type = #tpu.core_type<tc>, window_params = [{transform_indices = @transform_0, window_bounds = array<i64: 128, 128>}, {pipeline_mode = #tpu.pipeline_mode<synchronous>, transform_indices = @transform_1, window_bounds = array<i64: 5, 128, 128>}, {pipeline_mode = #tpu.pipeline_mode<synchronous>, transform_indices = @transform_2, window_bounds = array<i64: 5, 128>}, {transform_indices = @transform_3, window_bounds = array<i64: 128, 128>}]} {
    %c0 = arith.constant 0 : index
    %c0_0 = arith.constant 0 : index
    %0 = vector.load %arg1[%c0, %c0_0] : memref<128x128xf32, #tpu.memory_space<vmem>>, vector<128x128xf32>
    %1 = arith.truncf %0 : vector<128x128xf32> to vector<128x128xbf16>
    %c0_1 = arith.constant 0 : index
    %c0_2 = arith.constant 0 : index
    %c0_3 = arith.constant 0 : index
    %2 = vector.load %arg2[%c0_1, %c0_2, %c0_3] : memref<5x128x128xbf16, #tpu.memory_space<vmem>>, vector<1x128x128xbf16>
    %3 = vector.shape_cast %2 : vector<1x128x128xbf16> to vector<128x128xbf16>
    %cst = arith.constant dense<0.000000e+00> : vector<128x128xf32>
    %4 = tpu.matmul %1, %3, %cst {dimension_numbers = #tpu.dot_dimension_numbers<[1], [0], [0], [1], [0, 0, 1, 1], [], []>} : vector<128x128xbf16>, vector<128x128xbf16>, vector<128x128xf32> -> vector<128x128xf32>
    %c0_4 = arith.constant 0 : index
    %c0_5 = arith.constant 0 : index
    %5 = vector.load %arg3[%c0_4, %c0_5] : memref<5x128xf32, #tpu.memory_space<vmem>>, vector<1x128xf32>
    %6 = vector.broadcast %5 : vector<1x128xf32> to vector<128x128xf32>
    %7 = arith.addf %4, %6 : vector<128x128xf32>
    %cst_6 = arith.constant 0.000000e+00 : f32
    %8 = vector.broadcast %cst_6 : f32 to vector<128x128xf32>
    %9 = arith.maximumf %7, %8 : vector<128x128xf32>
    %10 = arith.truncf %9 : vector<128x128xf32> to vector<128x128xbf16>
    %c1 = arith.constant 1 : index
    %c0_7 = arith.constant 0 : index
    %c0_8 = arith.constant 0 : index
    %11 = vector.load %arg2[%c1, %c0_7, %c0_8] : memref<5x128x128xbf16, #tpu.memory_space<vmem>>, vector<1x128x128xbf16>
    %12 = vector.shape_cast %11 : vector<1x128x128xbf16> to vector<128x128xbf16>
    %cst_9 = arith.constant dense<0.000000e+00> : vector<128x128xf32>
    %13 = tpu.matmul %10, %12, %cst_9 {dimension_numbers = #tpu.dot_dimension_numbers<[1], [0], [0], [1], [0, 0, 1, 1], [], []>} : vector<128x128xbf16>, vector<128x128xbf16>, vector<128x128xf32> -> vector<128x128xf32>
    %c1_10 = arith.constant 1 : index
    %c0_11 = arith.constant 0 : index
    %14 = vector.load %arg3[%c1_10, %c0_11] : memref<5x128xf32, #tpu.memory_space<vmem>>, vector<1x128xf32>
    %15 = vector.broadcast %14 : vector<1x128xf32> to vector<128x128xf32>
    %16 = arith.addf %13, %15 : vector<128x128xf32>
    %cst_12 = arith.constant 0.000000e+00 : f32
    %17 = vector.broadcast %cst_12 : f32 to vector<128x128xf32>
    %18 = arith.maximumf %16, %17 : vector<128x128xf32>
    %19 = arith.truncf %18 : vector<128x128xf32> to vector<128x128xbf16>
    %c2 = arith.constant 2 : index
    %c0_13 = arith.constant 0 : index
    %c0_14 = arith.constant 0 : index
    %20 = vector.load %arg2[%c2, %c0_13, %c0_14] : memref<5x128x128xbf16, #tpu.memory_space<vmem>>, vector<1x128x128xbf16>
    %21 = vector.shape_cast %20 : vector<1x128x128xbf16> to vector<128x128xbf16>
    %cst_15 = arith.constant dense<0.000000e+00> : vector<128x128xf32>
    %22 = tpu.matmul %19, %21, %cst_15 {dimension_numbers = #tpu.dot_dimension_numbers<[1], [0], [0], [1], [0, 0, 1, 1], [], []>} : vector<128x128xbf16>, vector<128x128xbf16>, vector<128x128xf32> -> vector<128x128xf32>
    %c2_16 = arith.constant 2 : index
    %c0_17 = arith.constant 0 : index
    %23 = vector.load %arg3[%c2_16, %c0_17] : memref<5x128xf32, #tpu.memory_space<vmem>>, vector<1x128xf32>
    %24 = vector.broadcast %23 : vector<1x128xf32> to vector<128x128xf32>
    %25 = arith.addf %22, %24 : vector<128x128xf32>
    %cst_18 = arith.constant 0.000000e+00 : f32
    %26 = vector.broadcast %cst_18 : f32 to vector<128x128xf32>
    %27 = arith.maximumf %25, %26 : vector<128x128xf32>
    %28 = arith.truncf %27 : vector<128x128xf32> to vector<128x128xbf16>
    %c3 = arith.constant 3 : index
    %c0_19 = arith.constant 0 : index
    %c0_20 = arith.constant 0 : index
    %29 = vector.load %arg2[%c3, %c0_19, %c0_20] : memref<5x128x128xbf16, #tpu.memory_space<vmem>>, vector<1x128x128xbf16>
    %30 = vector.shape_cast %29 : vector<1x128x128xbf16> to vector<128x128xbf16>
    %cst_21 = arith.constant dense<0.000000e+00> : vector<128x128xf32>
    %31 = tpu.matmul %28, %30, %cst_21 {dimension_numbers = #tpu.dot_dimension_numbers<[1], [0], [0], [1], [0, 0, 1, 1], [], []>} : vector<128x128xbf16>, vector<128x128xbf16>, vector<128x128xf32> -> vector<128x128xf32>
    %c3_22 = arith.constant 3 : index
    %c0_23 = arith.constant 0 : index
    %32 = vector.load %arg3[%c3_22, %c0_23] : memref<5x128xf32, #tpu.memory_space<vmem>>, vector<1x128xf32>
    %33 = vector.broadcast %32 : vector<1x128xf32> to vector<128x128xf32>
    %34 = arith.addf %31, %33 : vector<128x128xf32>
    %cst_24 = arith.constant 0.000000e+00 : f32
    %35 = vector.broadcast %cst_24 : f32 to vector<128x128xf32>
    %36 = arith.maximumf %34, %35 : vector<128x128xf32>
    %37 = arith.truncf %36 : vector<128x128xf32> to vector<128x128xbf16>
    %c4 = arith.constant 4 : index
    %c0_25 = arith.constant 0 : index
    %c0_26 = arith.constant 0 : index
    %38 = vector.load %arg2[%c4, %c0_25, %c0_26] : memref<5x128x128xbf16, #tpu.memory_space<vmem>>, vector<1x128x128xbf16>
    %39 = vector.shape_cast %38 : vector<1x128x128xbf16> to vector<128x128xbf16>
    %cst_27 = arith.constant dense<0.000000e+00> : vector<128x128xf32>
    %40 = tpu.matmul %37, %39, %cst_27 {dimension_numbers = #tpu.dot_dimension_numbers<[1], [0], [0], [1], [0, 0, 1, 1], [], []>} : vector<128x128xbf16>, vector<128x128xbf16>, vector<128x128xf32> -> vector<128x128xf32>
    %c4_28 = arith.constant 4 : index
    %c0_29 = arith.constant 0 : index
    %41 = vector.load %arg3[%c4_28, %c0_29] : memref<5x128xf32, #tpu.memory_space<vmem>>, vector<1x128xf32>
    %42 = vector.broadcast %41 : vector<1x128xf32> to vector<128x128xf32>
    %43 = arith.addf %40, %42 : vector<128x128xf32>
    %c0_30 = arith.constant 0 : index
    %c0_31 = arith.constant 0 : index
    %44 = vector.load %arg4[%c0_30, %c0_31] : memref<128x128xf32, #tpu.memory_space<vmem>>, vector<128x128xf32>
    tpu.vector_store %arg4[%c0_30, %c0_31], %43 {strides = array<i32>} : memref<128x128xf32, #tpu.memory_space<vmem>>, vector<128x128xf32>,
    return
  }
  func.func @transform_0(%arg0: i32) -> (i32, i32) {
    %c0_i32 = arith.constant 0 : i32
    %c0_i32_0 = arith.constant 0 : i32
    return %arg0, %c0_i32 : i32, i32
  }
  func.func @transform_1(%arg0: i32) -> (i32, i32, i32) {
    %c0_i32 = arith.constant 0 : i32
    %c0_i32_0 = arith.constant 0 : i32
    %c0_i32_1 = arith.constant 0 : i32
    %c0_i32_2 = arith.constant 0 : i32
    return %c0_i32, %c0_i32_0, %c0_i32_1 : i32, i32, i32
  }
  func.func @transform_2(%arg0: i32) -> (i32, i32) {
    %c0_i32 = arith.constant 0 : i32
    %c0_i32_0 = arith.constant 0 : i32
    %c0_i32_1 = arith.constant 0 : i32
    return %c0_i32, %c0_i32_0 : i32, i32
  }
  func.func @transform_3(%arg0: i32) -> (i32, i32) {
    %c0_i32 = arith.constant 0 : i32
    %c0_i32_0 = arith.constant 0 : i32
    return %arg0, %c0_i32 : i32, i32
  }
}

</mosaic_0001>

<llo_original>
// kernel: tpu_custom_call.1
$region0: #{tpu_custom_call.1}
  #allocation0 [shape = 'u32[]', space=smem, size = 0x4, offset = 0x4, fixed_abs, tag = 'smem constant byte address 0x4 - core index']
  #allocation1 [shape = 'u32[72,128]{1,0:T(1,128)}', space=vmem, size = 0x9000, scoped, tag = 'internal scratch']
  %s0 = inlined_call_operand.hbm [shape: f32[512,128], index: 0, kind: input, shape index: {}]
  %s1 = inlined_call_operand.hbm [shape: bf16[5,128,128], index: 1, kind: input, shape index: {}]
  %s2 = inlined_call_operand.hbm [shape: f32[5,128], index: 2, kind: input, shape index: {}]
  %s3 = inlined_call_operand.hbm [shape: f32[512,128], index: 3, kind: output, shape index: {}]
  %s4 = sld [smem:[#allocation0]]
  $region57: #{tpu_custom_call.1} parent=0
    _
  %s6 = ssub.s32 1, %s4
  %s7 = scalar_select 0, %s6, %s4
  $region1: #{tpu_custom_call.1} parent=0
    #allocation2 [shape = 'u8[131072]{0}', space=vmem, size = 0x20000, scoped, tag = 'input window, operand 0']
    #allocation3 [shape = 's32[2]{0}', space=sflag, size = 0x8, scoped, tag = 'scoped memory for tpu_custom_call.1']
    #allocation4 [shape = 's32[2]{0}', space=sflag, size = 0x8, scoped, tag = 'scoped memory for tpu_custom_call.1']
    #allocation5 [shape = 'u8[163840]{0}', space=vmem, size = 0x28000, scoped, tag = 'input window, operand 1, single buffered']
    #allocation6 [shape = 's32[1]{0}', space=sflag, size = 0x4, scoped, tag = 'scoped memory for tpu_custom_call.1']
    #allocation7 [shape = 'u8[4096]{0}', space=vmem, size = 0x1000, scoped, tag = 'input window, operand 2, single buffered']
    #allocation8 [shape = 'u8[131072]{0}', space=vmem, size = 0x20000, scoped, tag = 'output window, operand 0']
    %8 = vsyncpa [#allocation3], 0
    %s9 = scalar_lea.sflag [#allocation3], 1
    %10 = vsyncpa %s9, 0
    %11 = vsyncpa [#allocation6], 0
    %12 = vsyncpa [#allocation4], 0
    %s13 = scalar_lea.sflag [#allocation4], 1
    %14 = vsyncpa %s13, 0
    loop: start=0, step=1, limit=6
    $region2: #{tpu_custom_call.1} parent=1 // loop_pre_header
      _
    $region3: #{tpu_custom_call.1} parent=1 // loop_header
      %s16 = sphi 0, %s20
      %p17 = scmp.ge.s32.totalorder %s16, 6
      %s26 = sphi 0, %s28
      %s29 = sphi 0, %s26
      %s30 = sphi 0, %s29
      %s46 = sphi 0, %s30
      %s50 = sphi 0, %s50
      %s52 = sphi 0, %s50
      %s53 = sphi 0, %s52
      %s67 = sphi 0, %s53
      %s71 = sphi 0, %s71
      %s73 = sphi 0, %s71
      %s74 = sphi 0, %s73
      %s88 = sphi 0, %s74
      %s94 = sphi 0, %s96
      %s97 = sphi 0, %s94
      %s98 = sphi 0, %s97
      %s114 = sphi 0, %s98
    $region4: #{tpu_custom_call.1} parent=1 // loop_header_branch
      %19 = sbr.rel (%p17) target = $region8
    $region5: #{tpu_custom_call.1} parent=1 // loop_body
      %s21 = ssub.s32 %s16, 1
      %s22 = ssub.s32 %s16, 2
      %s23 = sadd.s32 %s16, 1
      %s24 = ssub.s32 %s16, %s23
      %p25 = scmp.eq.s32.totalorder %s24, 0
      %s27 = sadd.s32 %s26, 1
      %s28 = scalar_select %p25, %s26, %s27
      %p31 = pneg %p25
      %p32 = scmp.eq.s32.totalorder %s16, 3
      %p33 = por %p31, %p32
      %p34 = scmp.ne.s32.totalorder %s26, %s29
      %p35 = scmp.eq.s32.totalorder %s16, 0
      %p36 = por %p34, %p35
      %p37 = scmp.ne.s32.totalorder %s26, %s29
      %p38 = scmp.eq.s32.totalorder %s21, 3
      %p39 = por %p37, %p38
      %p40 = scmp.ne.s32.totalorder %s29, %s30
      %p41 = scmp.eq.s32.totalorder %s21, 0
      %p42 = por %p40, %p41
      %p43 = scmp.ne.s32.totalorder %s29, %s30
      %p44 = scmp.eq.s32.totalorder %s22, 3
      %p45 = por %p43, %p44
      %p47 = scmp.ne.s32.totalorder %s30, %s46
      %p48 = scmp.eq.s32.totalorder %s22, 0
      %p49 = por %p47, %p48
      %s51 = sadd.s32 %s50, 1
      %p54 = scmp.eq.s32.totalorder %s16, 3
      %p55 = scmp.ne.s32.totalorder %s50, %s52
      %p56 = scmp.eq.s32.totalorder %s16, 0
      %p57 = por %p55, %p56
      %p58 = scmp.ne.s32.totalorder %s50, %s52
      %p59 = scmp.eq.s32.totalorder %s21, 3
      %p60 = por %p58, %p59
      %p61 = scmp.ne.s32.totalorder %s52, %s53
      %p62 = scmp.eq.s32.totalorder %s21, 0
      %p63 = por %p61, %p62
      %p64 = scmp.ne.s32.totalorder %s52, %s53
      %p65 = scmp.eq.s32.totalorder %s22, 3
      %p66 = por %p64, %p65
      %p68 = scmp.ne.s32.totalorder %s53, %s67
      %p69 = scmp.eq.s32.totalorder %s22, 0
      %p70 = por %p68, %p69
      %s72 = sadd.s32 %s71, 1
      %p75 = scmp.eq.s32.totalorder %s16, 3
      %p76 = scmp.ne.s32.totalorder %s71, %s73
      %p77 = scmp.eq.s32.totalorder %s16, 0
      %p78 = por %p76, %p77
      %p79 = scmp.ne.s32.totalorder %s71, %s73
      %p80 = scmp.eq.s32.totalorder %s21, 3
      %p81 = por %p79, %p80
      %p82 = scmp.ne.s32.totalorder %s73, %s74
      %p83 = scmp.eq.s32.totalorder %s21, 0
      %p84 = por %p82, %p83
      %p85 = scmp.ne.s32.totalorder %s73, %s74
      %p86 = scmp.eq.s32.totalorder %s22, 3
      %p87 = por %p85, %p86
      %p89 = scmp.ne.s32.totalorder %s74, %s88
      %p90 = scmp.eq.s32.totalorder %s22, 0
      %p91 = por %p89, %p90
      %s92 = ssub.s32 %s16, %s23
      %p93 = scmp.eq.s32.totalorder %s92, 0
      %s95 = sadd.s32 %s94, 1
      %s96 = scalar_select %p93, %s94, %s95
      %p99 = pneg %p93
      %p100 = scmp.eq.s32.totalorder %s16, 3
      %p101 = por %p99, %p100
      %p102 = scmp.ne.s32.totalorder %s94, %s97
      %p103 = scmp.eq.s32.totalorder %s16, 0
      %p104 = por %p102, %p103
      %p105 = scmp.ne.s32.totalorder %s94, %s97
      %p106 = scmp.eq.s32.totalorder %s21, 3
      %p107 = por %p105, %p106
      %p108 = scmp.ne.s32.totalorder %s97, %s98
      %p109 = scmp.eq.s32.totalorder %s21, 0
      %p110 = por %p108, %p109
      %p111 = scmp.ne.s32.totalorder %s97, %s98
      %p112 = scmp.eq.s32.totalorder %s22, 3
      %p113 = por %p111, %p112
      %p115 = scmp.ne.s32.totalorder %s98, %s114
      %p116 = scmp.eq.s32.totalorder %s22, 0
      %p117 = por %p115, %p116
      %p118 = scmp.le.s32.totalorder 1, %s16
      %p119 = scmp.lt.s32.totalorder %s16, 5
      %p120 = pnand %p118, %p119
      %p121 = pneg %p120
      // Predicated region
      $region9: #{tpu_custom_call.1} parent=5 // pred_check
        _
      $region10: #{tpu_custom_call.1} parent=5 // pred_check_branch
        %123 = sbr.rel (%p120) target = $region12
      $region11: #{tpu_custom_call.1} parent=5 // pred_region
        %s124 = ssub.s32 %s16, 1
        // Predicated region
        $region13: #{tpu_custom_call.1} parent=11 // pred_check
          %p125 = pneg %p63
        $region14: #{tpu_custom_call.1} parent=11 // pred_check_branch
          %127 = sbr.rel (%p125) target = $region16
        $region15: #{tpu_custom_call.1} parent=11 // pred_region
          %129 = vsyncadd [#allocation6], 0
          %s130 = sshll.u32 %s1, 4
          %s131 = int_to_ptr.hbm [resolvable:$true] %s130
          %s132 = sshll.u32 [#allocation5], 4
          %s133 = int_to_ptr.vmem [resolvable:$true] %s132
          %138 = dma.hbm_to_vmem [thread:$0]  %s131, 5120, %s133, [#allocation6], 64, 64, 4
        $region16: #{tpu_custom_call.1} parent=11 // pred_fallthru
          _
        // Predicated region
        $region17: #{tpu_custom_call.1} parent=11 // pred_check
          %p139 = pneg %p84
        $region18: #{tpu_custom_call.1} parent=11 // pred_check_branch
          %141 = sbr.rel (%p139) target = $region20
        $region19: #{tpu_custom_call.1} parent=11 // pred_region
          %143 = vsyncadd [#allocation6], 0
          %s145 = sshll.u32 %s2, 4
          %s146 = int_to_ptr.hbm [resolvable:$true] %s145
          %s147 = sshll.u32 [#allocation7], 4
          %s148 = int_to_ptr.vmem [resolvable:$true] %s147
          %150 = dma.hbm_to_vmem [thread:$0]  %s146, 128, %s148, [#allocation6]
        $region20: #{tpu_custom_call.1} parent=11 // pred_fallthru
          _
      $region12: #{tpu_custom_call.1} parent=5 // pred_fallthru
        _
      %p151 = scmp.lt.s32.totalorder %s16, 4
      // Predicated region
      $region21: #{tpu_custom_call.1} parent=5 // pred_check
        %p152 = pneg %p151
      $region22: #{tpu_custom_call.1} parent=5 // pred_check_branch
        %154 = sbr.rel (%p152) target = $region24
      $region23: #{tpu_custom_call.1} parent=5 // pred_region
        // Predicated region
        $region25: #{tpu_custom_call.1} parent=23 // pred_check
          %p155 = pneg %p36
        $region26: #{tpu_custom_call.1} parent=23 // pred_check_branch
          %157 = sbr.rel (%p155) target = $region28
        $region27: #{tpu_custom_call.1} parent=23 // pred_region
          %s158 = sand.u32 %s26, 1
          %s159 = scalar_lea.sflag [#allocation3], %s158
          %s160 = sand.u32 %s26, 1
          %s161 = smul.addr %s160, 128
          %s162 = scalar_lea.vmem [#allocation2], %s161
          %s163 = smul.u32 16, %s16
          %165 = vsyncadd %s159, 0
          %s166 = smul.addr %s163, 8
          %s167 = scalar_lea.hbm %s0, %s166
          %s168 = sshll.u32 %s167, 4
          %s169 = int_to_ptr.hbm [resolvable:$true] %s168
          %s170 = sshll.u32 %s162, 4
          %s171 = int_to_ptr.vmem [resolvable:$true] %s170
          %176 = dma.hbm_to_vmem [thread:$0]  %s169, 2048, %s171, %s159, 128, 128, 8
        $region28: #{tpu_custom_call.1} parent=23 // pred_fallthru
          _
      $region24: #{tpu_custom_call.1} parent=5 // pred_fallthru
        _
      %p177 = scmp.le.s32.totalorder 1, %s16
      %p178 = scmp.lt.s32.totalorder %s16, 5
      %p179 = pnand %p177, %p178
      %p180 = pneg %p179
      // Predicated region
      $region29: #{tpu_custom_call.1} parent=5 // pred_check
        _
      $region30: #{tpu_custom_call.1} parent=5 // pred_check_branch
        %182 = sbr.rel (%p179) target = $region32
      $region31: #{tpu_custom_call.1} parent=5 // pred_region
        %s183 = ssub.s32 %s16, 1
        %s184 = sand.u32 %s29, 1
        %s185 = scalar_lea.sflag [#allocation3], %s184
        %s186 = sand.u32 %s29, 1
        %s187 = smul.addr %s186, 128
        %s188 = scalar_lea.vmem [#allocation2], %s187
        // Predicated region
        $region33: #{tpu_custom_call.1} parent=31 // pred_check
          %p189 = pneg %p42
        $region34: #{tpu_custom_call.1} parent=31 // pred_check_branch
          %191 = sbr.rel (%p189) target = $region36
        $region35: #{tpu_custom_call.1} parent=31 // pred_region
          %193 = dma.done %s185, 2048
        $region36: #{tpu_custom_call.1} parent=31 // pred_fallthru
          _
        // Predicated region
        $region37: #{tpu_custom_call.1} parent=31 // pred_check
          %p194 = pneg %p63
        $region38: #{tpu_custom_call.1} parent=31 // pred_check_branch
          %196 = sbr.rel (%p194) target = $region40
        $region39: #{tpu_custom_call.1} parent=31 // pred_region
          %198 = dma.done [#allocation6], 5120
        $region40: #{tpu_custom_call.1} parent=31 // pred_fallthru
          _
        // Predicated region
        $region41: #{tpu_custom_call.1} parent=31 // pred_check
          %p199 = pneg %p84
        $region42: #{tpu_custom_call.1} parent=31 // pred_check_branch
          %201 = sbr.rel (%p199) target = $region44
        $region43: #{tpu_custom_call.1} parent=31 // pred_region
          %203 = dma.done [#allocation6], 128
        $region44: #{tpu_custom_call.1} parent=31 // pred_fallthru
          _
        %s204 = sand.u32 %s29, 1
        %s205 = scalar_lea.sflag [#allocation3], %s204
        %s206 = sand.u32 %s29, 1
        %s207 = smul.addr %s206, 128
        %s208 = scalar_lea.vmem [#allocation2], %s207
        %p209 = pneg %p42
        %p210 = pneg %p39
        %p211 = pneg %p63
        %p212 = pneg %p60
        %p213 = pneg %p84
        %p214 = pneg %p81
        %p215 = pneg %p110
        %p216 = pneg %p107
        %s217 = sand.u32 %s97, 1
        %s218 = scalar_lea.sflag [#allocation4], %s217
        %s219 = sand.u32 %s97, 1
        %s220 = smul.addr %s219, 128
        %s221 = scalar_lea.vmem [#allocation8], %s220
        %s222 = smul.u32 16, %s21
        %s223 = smul.u32 16, %s21
        %v224 = vld [vmem:[%s188] sm:$0xff]
        %v225 = vld [vmem:[%s188 + $0x8] sm:$0xff]
        %v226 = vld [vmem:[%s188 + $0x10] sm:$0xff]
        %v227 = vld [vmem:[%s188 + $0x18] sm:$0xff]
        %v228 = vld [vmem:[%s188 + $0x20] sm:$0xff]
        %v229 = vld [vmem:[%s188 + $0x28] sm:$0xff]
        %v230 = vld [vmem:[%s188 + $0x30] sm:$0xff]
        %v231 = vld [vmem:[%s188 + $0x38] sm:$0xff]
        %v232 = vld [vmem:[%s188 + $0x40] sm:$0xff]
        %v233 = vld [vmem:[%s188 + $0x48] sm:$0xff]
        %v234 = vld [vmem:[%s188 + $0x50] sm:$0xff]
        %v235 = vld [vmem:[%s188 + $0x58] sm:$0xff]
        %v236 = vld [vmem:[%s188 + $0x60] sm:$0xff]
        %v237 = vld [vmem:[%s188 + $0x68] sm:$0xff]
        %v238 = vld [vmem:[%s188 + $0x70] sm:$0xff]
        %v239 = vld [vmem:[%s188 + $0x78] sm:$0xff]
        %v240 = vpack.c.bf16 %v225, %v224
        %v241 = vpack.c.bf16 %v227, %v226
        %v242 = vpack.c.bf16 %v229, %v228
        %v243 = vpack.c.bf16 %v231, %v230
        %v244 = vpack.c.bf16 %v233, %v232
        %v245 = vpack.c.bf16 %v235, %v234
        %v246 = vpack.c.bf16 %v237, %v236
        %v247 = vpack.c.bf16 %v239, %v238
        %v248 = vld [vmem:[#allocation5] sm:$0xf]
        %v249 = vld [vmem:[#allocation5 + $0x4] sm:$0xf]
        %v250 = vld [vmem:[#allocation5 + $0x8] sm:$0xf]
        %v251 = vld [vmem:[#allocation5 + $0xc] sm:$0xf]
        %v252 = vld [vmem:[#allocation5 + $0x10] sm:$0xf]
        %v253 = vld [vmem:[#allocation5 + $0x14] sm:$0xf]
        %v254 = vld [vmem:[#allocation5 + $0x18] sm:$0xf]
        %v255 = vld [vmem:[#allocation5 + $0x1c] sm:$0xf]
        %v256 = vld [vmem:[#allocation5 + $0x20] sm:$0xf]
        %v257 = vld [vmem:[#allocation5 + $0x24] sm:$0xf]
        %v258 = vld [vmem:[#allocation5 + $0x28] sm:$0xf]
        %v259 = vld [vmem:[#allocation5 + $0x2c] sm:$0xf]
        %v260 = vld [vmem:[#allocation5 + $0x30] sm:$0xf]
        %v261 = vld [vmem:[#allocation5 + $0x34] sm:$0xf]
        %v262 = vld [vmem:[#allocation5 + $0x38] sm:$0xf]
        %v263 = vld [vmem:[#allocation5 + $0x3c] sm:$0xf]
        %v264 = vld [vmem:[#allocation7] sm:$0x1]
        %v265 = vperm.slane %v264, 0
        %v282 = vunpack.c.l.b16 %v248
        %v283 = vunpack.c.l.b16 %v249
        %v284 = vunpack.c.l.b16 %v250
        %v285 = vunpack.c.l.b16 %v251
        %v286 = vunpack.c.l.b16 %v252
        %v287 = vunpack.c.l.b16 %v253
        %v288 = vunpack.c.l.b16 %v254
        %v289 = vunpack.c.l.b16 %v255
        %v290 = vunpack.c.l.b16 %v256
        %v291 = vunpack.c.l.b16 %v257
        %v292 = vunpack.c.l.b16 %v258
        %v293 = vunpack.c.l.b16 %v259
        %v294 = vunpack.c.l.b16 %v260
        %v295 = vunpack.c.l.b16 %v261
        %v296 = vunpack.c.l.b16 %v262
        %v297 = vunpack.c.l.b16 %v263
        %v298 = vpack.c.b16 %v283, %v282
        %v299 = vpack.c.b16 %v285, %v284
        %v300 = vpack.c.b16 %v287, %v286
        %v301 = vpack.c.b16 %v289, %v288
        %v302 = vpack.c.b16 %v291, %v290
        %v303 = vpack.c.b16 %v293, %v292
        %v304 = vpack.c.b16 %v295, %v294
        %v305 = vpack.c.b16 %v297, %v296
        %314 = vmatpush.bf16.msra.mxu0 %v305
        %315 = vmatpush.bf16.msra.mxu0 %v304
        %316 = vmatpush.bf16.msra.mxu0 %v303
        %317 = vmatpush.bf16.msra.mxu0 %v302
        %318 = vmatpush.bf16.msra.mxu0 %v301
        %319 = vmatpush.bf16.msra.mxu0 %v300
        %320 = vmatpush.bf16.msra.mxu0 %v299
        %321 = vmatpush.bf16.msra.mxu0 %v298
        %322 = vmatmul.bf16.gmra.mxu0 %v240
        %v323 = vpop.f32.mrf.mxu0
        %v324 = vadd.f32 %v265, %v323
        %v325 = vpop.f32.mrf.mxu0
        %v326 = vadd.f32 %v265, %v325
        %327 = vmatmul.bf16.gmra.mxu0 %v241
        %v328 = vpop.f32.mrf.mxu0
        %v329 = vadd.f32 %v265, %v328
        %v330 = vpop.f32.mrf.mxu0
        %v331 = vadd.f32 %v265, %v330
        %332 = vmatmul.bf16.gmra.mxu0 %v242
        %v333 = vpop.f32.mrf.mxu0
        %v334 = vadd.f32 %v265, %v333
        %v335 = vpop.f32.mrf.mxu0
        %v336 = vadd.f32 %v265, %v335
        %337 = vmatmul.bf16.gmra.mxu0 %v243
        %v338 = vpop.f32.mrf.mxu0
        %v339 = vadd.f32 %v265, %v338
        %v340 = vpop.f32.mrf.mxu0
        %v341 = vadd.f32 %v265, %v340
        %342 = vmatmul.bf16.gmra.mxu0 %v244
        %v343 = vpop.f32.mrf.mxu0
        %v344 = vadd.f32 %v265, %v343
        %v345 = vpop.f32.mrf.mxu0
        %v346 = vadd.f32 %v265, %v345
        %347 = vmatmul.bf16.gmra.mxu0 %v245
        %v348 = vpop.f32.mrf.mxu0
        %v349 = vadd.f32 %v265, %v348
        %v350 = vpop.f32.mrf.mxu0
        %v351 = vadd.f32 %v265, %v350
        %352 = vmatmul.bf16.gmra.mxu0 %v246
        %v353 = vpop.f32.mrf.mxu0
        %v354 = vadd.f32 %v265, %v353
        %v355 = vpop.f32.mrf.mxu0
        %v356 = vadd.f32 %v265, %v355
        %357 = vmatmul.bf16.gmra.mxu0 %v247
        %v358 = vpop.f32.mrf.mxu0
        %v359 = vadd.f32 %v265, %v358
        %v360 = vpop.f32.mrf.mxu0
        %v361 = vadd.f32 %v265, %v360
        %362 = vdwg.mxu0
        %v363 = vmax.f32 %v324, 0.0
        %v364 = vmax.f32 %v326, 0.0
        %v365 = vmax.f32 %v329, 0.0
        %v366 = vmax.f32 %v331, 0.0
        %v367 = vmax.f32 %v334, 0.0
        %v368 = vmax.f32 %v336, 0.0
        %v369 = vmax.f32 %v339, 0.0
        %v370 = vmax.f32 %v341, 0.0
        %v371 = vmax.f32 %v344, 0.0
        %v372 = vmax.f32 %v346, 0.0
        %v373 = vmax.f32 %v349, 0.0
        %v374 = vmax.f32 %v351, 0.0
        %v375 = vmax.f32 %v354, 0.0
        %v376 = vmax.f32 %v356, 0.0
        %v377 = vmax.f32 %v359, 0.0
        %v378 = vmax.f32 %v361, 0.0
        %v379 = vpack.c.bf16 %v364, %v363
        %v380 = vpack.c.bf16 %v366, %v365
        %v381 = vpack.c.bf16 %v368, %v367
        %v382 = vpack.c.bf16 %v370, %v369
        %v383 = vpack.c.bf16 %v372, %v371
        %v384 = vpack.c.bf16 %v374, %v373
        %v385 = vpack.c.bf16 %v376, %v375
        %v386 = vpack.c.bf16 %v378, %v377
        %s387 = scalar_lea.vmem [#allocation5], 64
        %v388 = vld [vmem:[%s387] sm:$0xf]
        %v389 = vld [vmem:[%s387 + $0x4] sm:$0xf]
        %v390 = vld [vmem:[%s387 + $0x8] sm:$0xf]
        %v391 = vld [vmem:[%s387 + $0xc] sm:$0xf]
        %v392 = vld [vmem:[%s387 + $0x10] sm:$0xf]
        %v393 = vld [vmem:[%s387 + $0x14] sm:$0xf]
        %v394 = vld [vmem:[%s387 + $0x18] sm:$0xf]
        %v395 = vld [vmem:[%s387 + $0x1c] sm:$0xf]
        %v396 = vld [vmem:[%s387 + $0x20] sm:$0xf]
        %v397 = vld [vmem:[%s387 + $0x24] sm:$0xf]
        %v398 = vld [vmem:[%s387 + $0x28] sm:$0xf]
        %v399 = vld [vmem:[%s387 + $0x2c] sm:$0xf]
        %v400 = vld [vmem:[%s387 + $0x30] sm:$0xf]
        %v401 = vld [vmem:[%s387 + $0x34] sm:$0xf]
        %v402 = vld [vmem:[%s387 + $0x38] sm:$0xf]
        %v403 = vld [vmem:[%s387 + $0x3c] sm:$0xf]
        %v404 = vld [vmem:[#allocation7 + $0x1] sm:$0x1]
        %v405 = vperm.slane %v404, 0
        %v422 = vunpack.c.l.b16 %v388
        %v423 = vunpack.c.l.b16 %v389
        %v424 = vunpack.c.l.b16 %v390
        %v425 = vunpack.c.l.b16 %v391
        %v426 = vunpack.c.l.b16 %v392
        %v427 = vunpack.c.l.b16 %v393
        %v428 = vunpack.c.l.b16 %v394
        %v429 = vunpack.c.l.b16 %v395
        %v430 = vunpack.c.l.b16 %v396
        %v431 = vunpack.c.l.b16 %v397
        %v432 = vunpack.c.l.b16 %v398
        %v433 = vunpack.c.l.b16 %v399
        %v434 = vunpack.c.l.b16 %v400
        %v435 = vunpack.c.l.b16 %v401
        %v436 = vunpack.c.l.b16 %v402
        %v437 = vunpack.c.l.b16 %v403
        %v438 = vpack.c.b16 %v423, %v422
        %v439 = vpack.c.b16 %v425, %v424
        %v440 = vpack.c.b16 %v427, %v426
        %v441 = vpack.c.b16 %v429, %v428
        %v442 = vpack.c.b16 %v431, %v430
        %v443 = vpack.c.b16 %v433, %v432
        %v444 = vpack.c.b16 %v435, %v434
        %v445 = vpack.c.b16 %v437, %v436
        %454 = vmatpush.bf16.msra.mxu0 %v445
        %455 = vmatpush.bf16.msra.mxu0 %v444
        %456 = vmatpush.bf16.msra.mxu0 %v443
        %457 = vmatpush.bf16.msra.mxu0 %v442
        %458 = vmatpush.bf16.msra.mxu0 %v441
        %459 = vmatpush.bf16.msra.mxu0 %v440
        %460 = vmatpush.bf16.msra.mxu0 %v439
        %461 = vmatpush.bf16.msra.mxu0 %v438
        %462 = vmatmul.bf16.gmra.mxu0 %v379
        %v463 = vpop.f32.mrf.mxu0
        %v464 = vadd.f32 %v405, %v463
        %v465 = vpop.f32.mrf.mxu0
        %v466 = vadd.f32 %v405, %v465
        %467 = vmatmul.bf16.gmra.mxu0 %v380
        %v468 = vpop.f32.mrf.mxu0
        %v469 = vadd.f32 %v405, %v468
        %v470 = vpop.f32.mrf.mxu0
        %v471 = vadd.f32 %v405, %v470
        %472 = vmatmul.bf16.gmra.mxu0 %v381
        %v473 = vpop.f32.mrf.mxu0
        %v474 = vadd.f32 %v405, %v473
        %v475 = vpop.f32.mrf.mxu0
        %v476 = vadd.f32 %v405, %v475
        %477 = vmatmul.bf16.gmra.mxu0 %v382
        %v478 = vpop.f32.mrf.mxu0
        %v479 = vadd.f32 %v405, %v478
        %v480 = vpop.f32.mrf.mxu0
        %v481 = vadd.f32 %v405, %v480
        %482 = vmatmul.bf16.gmra.mxu0 %v383
        %v483 = vpop.f32.mrf.mxu0
        %v484 = vadd.f32 %v405, %v483
        %v485 = vpop.f32.mrf.mxu0
        %v486 = vadd.f32 %v405, %v485
        %487 = vmatmul.bf16.gmra.mxu0 %v384
        %v488 = vpop.f32.mrf.mxu0
        %v489 = vadd.f32 %v405, %v488
        %v490 = vpop.f32.mrf.mxu0
        %v491 = vadd.f32 %v405, %v490
        %492 = vmatmul.bf16.gmra.mxu0 %v385
        %v493 = vpop.f32.mrf.mxu0
        %v494 = vadd.f32 %v405, %v493
        %v495 = vpop.f32.mrf.mxu0
        %v496 = vadd.f32 %v405, %v495
        %497 = vmatmul.bf16.gmra.mxu0 %v386
        %v498 = vpop.f32.mrf.mxu0
        %v499 = vadd.f32 %v405, %v498
        %v500 = vpop.f32.mrf.mxu0
        %v501 = vadd.f32 %v405, %v500
        %502 = vdwg.mxu0
        %v503 = vmax.f32 %v464, 0.0
        %v504 = vmax.f32 %v466, 0.0
        %v505 = vmax.f32 %v469, 0.0
        %v506 = vmax.f32 %v471, 0.0
        %v507 = vmax.f32 %v474, 0.0
        %v508 = vmax.f32 %v476, 0.0
        %v509 = vmax.f32 %v479, 0.0
        %v510 = vmax.f32 %v481, 0.0
        %v511 = vmax.f32 %v484, 0.0
        %v512 = vmax.f32 %v486, 0.0
        %v513 = vmax.f32 %v489, 0.0
        %v514 = vmax.f32 %v491, 0.0
        %v515 = vmax.f32 %v494, 0.0
        %v516 = vmax.f32 %v496, 0.0
        %v517 = vmax.f32 %v499, 0.0
        %v518 = vmax.f32 %v501, 0.0
        %v519 = vpack.c.bf16 %v504, %v503
        %v520 = vpack.c.bf16 %v506, %v505
        %v521 = vpack.c.bf16 %v508, %v507
        %v522 = vpack.c.bf16 %v510, %v509
        %v523 = vpack.c.bf16 %v512, %v511
        %v524 = vpack.c.bf16 %v514, %v513
        %v525 = vpack.c.bf16 %v516, %v515
        %v526 = vpack.c.bf16 %v518, %v517
        %s527 = scalar_lea.vmem [#allocation5], 128
        %v528 = vld [vmem:[%s527] sm:$0xf]
        %v529 = vld [vmem:[%s527 + $0x4] sm:$0xf]
        %v530 = vld [vmem:[%s527 + $0x8] sm:$0xf]
        %v531 = vld [vmem:[%s527 + $0xc] sm:$0xf]
        %v532 = vld [vmem:[%s527 + $0x10] sm:$0xf]
        %v533 = vld [vmem:[%s527 + $0x14] sm:$0xf]
        %v534 = vld [vmem:[%s527 + $0x18] sm:$0xf]
        %v535 = vld [vmem:[%s527 + $0x1c] sm:$0xf]
        %v536 = vld [vmem:[%s527 + $0x20] sm:$0xf]
        %v537 = vld [vmem:[%s527 + $0x24] sm:$0xf]
        %v538 = vld [vmem:[%s527 + $0x28] sm:$0xf]
        %v539 = vld [vmem:[%s527 + $0x2c] sm:$0xf]
        %v540 = vld [vmem:[%s527 + $0x30] sm:$0xf]
        %v541 = vld [vmem:[%s527 + $0x34] sm:$0xf]
        %v542 = vld [vmem:[%s527 + $0x38] sm:$0xf]
        %v543 = vld [vmem:[%s527 + $0x3c] sm:$0xf]
        %v544 = vld [vmem:[#allocation7 + $0x2] sm:$0x1]
        %v545 = vperm.slane %v544, 0
        %v562 = vunpack.c.l.b16 %v528
        %v563 = vunpack.c.l.b16 %v529
        %v564 = vunpack.c.l.b16 %v530
        %v565 = vunpack.c.l.b16 %v531
        %v566 = vunpack.c.l.b16 %v532
        %v567 = vunpack.c.l.b16 %v533
        %v568 = vunpack.c.l.b16 %v534
        %v569 = vunpack.c.l.b16 %v535
        %v570 = vunpack.c.l.b16 %v536
        %v571 = vunpack.c.l.b16 %v537
        %v572 = vunpack.c.l.b16 %v538
        %v573 = vunpack.c.l.b16 %v539
        %v574 = vunpack.c.l.b16 %v540
        %v575 = vunpack.c.l.b16 %v541
        %v576 = vunpack.c.l.b16 %v542
        %v577 = vunpack.c.l.b16 %v543
        %v578 = vpack.c.b16 %v563, %v562
        %v579 = vpack.c.b16 %v565, %v564
        %v580 = vpack.c.b16 %v567, %v566
        %v581 = vpack.c.b16 %v569, %v568
        %v582 = vpack.c.b16 %v571, %v570
        %v583 = vpack.c.b16 %v573, %v572
        %v584 = vpack.c.b16 %v575, %v574
        %v585 = vpack.c.b16 %v577, %v576
        %594 = vmatpush.bf16.msra.mxu0 %v585
        %595 = vmatpush.bf16.msra.mxu0 %v584
        %596 = vmatpush.bf16.msra.mxu0 %v583
        %597 = vmatpush.bf16.msra.mxu0 %v582
        %598 = vmatpush.bf16.msra.mxu0 %v581
        %599 = vmatpush.bf16.msra.mxu0 %v580
        %600 = vmatpush.bf16.msra.mxu0 %v579
        %601 = vmatpush.bf16.msra.mxu0 %v578
        %602 = vmatmul.bf16.gmra.mxu0 %v519
        %v603 = vpop.f32.mrf.mxu0
        %v604 = vadd.f32 %v545, %v603
        %v605 = vpop.f32.mrf.mxu0
        %v606 = vadd.f32 %v545, %v605
        %607 = vmatmul.bf16.gmra.mxu0 %v520
        %v608 = vpop.f32.mrf.mxu0
        %v609 = vadd.f32 %v545, %v608
        %v610 = vpop.f32.mrf.mxu0
        %v611 = vadd.f32 %v545, %v610
        %612 = vmatmul.bf16.gmra.mxu0 %v521
        %v613 = vpop.f32.mrf.mxu0
        %v614 = vadd.f32 %v545, %v613
        %v615 = vpop.f32.mrf.mxu0
        %v616 = vadd.f32 %v545, %v615
        %617 = vmatmul.bf16.gmra.mxu0 %v522
        %v618 = vpop.f32.mrf.mxu0
        %v619 = vadd.f32 %v545, %v618
        %v620 = vpop.f32.mrf.mxu0
        %v621 = vadd.f32 %v545, %v620
        %622 = vmatmul.bf16.gmra.mxu0 %v523
        %v623 = vpop.f32.mrf.mxu0
        %v624 = vadd.f32 %v545, %v623
        %v625 = vpop.f32.mrf.mxu0
        %v626 = vadd.f32 %v545, %v625
        %627 = vmatmul.bf16.gmra.mxu0 %v524
        %v628 = vpop.f32.mrf.mxu0
        %v629 = vadd.f32 %v545, %v628
        %v630 = vpop.f32.mrf.mxu0
        %v631 = vadd.f32 %v545, %v630
        %632 = vmatmul.bf16.gmra.mxu0 %v525
        %v633 = vpop.f32.mrf.mxu0
        %v634 = vadd.f32 %v545, %v633
        %v635 = vpop.f32.mrf.mxu0
        %v636 = vadd.f32 %v545, %v635
        %637 = vmatmul.bf16.gmra.mxu0 %v526
        %v638 = vpop.f32.mrf.mxu0
        %v639 = vadd.f32 %v545, %v638
        %v640 = vpop.f32.mrf.mxu0
        %v641 = vadd.f32 %v545, %v640
        %642 = vdwg.mxu0
        %v643 = vmax.f32 %v604, 0.0
        %v644 = vmax.f32 %v606, 0.0
        %v645 = vmax.f32 %v609, 0.0
        %v646 = vmax.f32 %v611, 0.0
        %v647 = vmax.f32 %v614, 0.0
        %v648 = vmax.f32 %v616, 0.0
        %v649 = vmax.f32 %v619, 0.0
        %v650 = vmax.f32 %v621, 0.0
        %v651 = vmax.f32 %v624, 0.0
        %v652 = vmax.f32 %v626, 0.0
        %v653 = vmax.f32 %v629, 0.0
        %v654 = vmax.f32 %v631, 0.0
        %v655 = vmax.f32 %v634, 0.0
        %v656 = vmax.f32 %v636, 0.0
        %v657 = vmax.f32 %v639, 0.0
        %v658 = vmax.f32 %v641, 0.0
        %v659 = vpack.c.bf16 %v644, %v643
        %v660 = vpack.c.bf16 %v646, %v645
        %v661 = vpack.c.bf16 %v648, %v647
        %v662 = vpack.c.bf16 %v650, %v649
        %v663 = vpack.c.bf16 %v652, %v651
        %v664 = vpack.c.bf16 %v654, %v653
        %v665 = vpack.c.bf16 %v656, %v655
        %v666 = vpack.c.bf16 %v658, %v657
        %s667 = scalar_lea.vmem [#allocation5], 192
        %v668 = vld [vmem:[%s667] sm:$0xf]
        %v669 = vld [vmem:[%s667 + $0x4] sm:$0xf]
        %v670 = vld [vmem:[%s667 + $0x8] sm:$0xf]
        %v671 = vld [vmem:[%s667 + $0xc] sm:$0xf]
        %v672 = vld [vmem:[%s667 + $0x10] sm:$0xf]
        %v673 = vld [vmem:[%s667 + $0x14] sm:$0xf]
        %v674 = vld [vmem:[%s667 + $0x18] sm:$0xf]
        %v675 = vld [vmem:[%s667 + $0x1c] sm:$0xf]
        %v676 = vld [vmem:[%s667 + $0x20] sm:$0xf]
        %v677 = vld [vmem:[%s667 + $0x24] sm:$0xf]
        %v678 = vld [vmem:[%s667 + $0x28] sm:$0xf]
        %v679 = vld [vmem:[%s667 + $0x2c] sm:$0xf]
        %v680 = vld [vmem:[%s667 + $0x30] sm:$0xf]
        %v681 = vld [vmem:[%s667 + $0x34] sm:$0xf]
        %v682 = vld [vmem:[%s667 + $0x38] sm:$0xf]
        %v683 = vld [vmem:[%s667 + $0x3c] sm:$0xf]
        %v684 = vld [vmem:[#allocation7 + $0x3] sm:$0x1]
        %v685 = vperm.slane %v684, 0
        %v702 = vunpack.c.l.b16 %v668
        %v703 = vunpack.c.l.b16 %v669
        %v704 = vunpack.c.l.b16 %v670
        %v705 = vunpack.c.l.b16 %v671
        %v706 = vunpack.c.l.b16 %v672
        %v707 = vunpack.c.l.b16 %v673
        %v708 = vunpack.c.l.b16 %v674
        %v709 = vunpack.c.l.b16 %v675
        %v710 = vunpack.c.l.b16 %v676
        %v711 = vunpack.c.l.b16 %v677
        %v712 = vunpack.c.l.b16 %v678
        %v713 = vunpack.c.l.b16 %v679
        %v714 = vunpack.c.l.b16 %v680
        %v715 = vunpack.c.l.b16 %v681
        %v716 = vunpack.c.l.b16 %v682
        %v717 = vunpack.c.l.b16 %v683
        %v718 = vpack.c.b16 %v703, %v702
        %v719 = vpack.c.b16 %v705, %v704
        %v720 = vpack.c.b16 %v707, %v706
        %v721 = vpack.c.b16 %v709, %v708
        %v722 = vpack.c.b16 %v711, %v710
        %v723 = vpack.c.b16 %v713, %v712
        %v724 = vpack.c.b16 %v715, %v714
        %v725 = vpack.c.b16 %v717, %v716
        %734 = vmatpush.bf16.msra.mxu0 %v725
        %735 = vmatpush.bf16.msra.mxu0 %v724
        %736 = vmatpush.bf16.msra.mxu0 %v723
        %737 = vmatpush.bf16.msra.mxu0 %v722
        %738 = vmatpush.bf16.msra.mxu0 %v721
        %739 = vmatpush.bf16.msra.mxu0 %v720
        %740 = vmatpush.bf16.msra.mxu0 %v719
        %741 = vmatpush.bf16.msra.mxu0 %v718
        %742 = vmatmul.bf16.gmra.mxu0 %v659
        %v743 = vpop.f32.mrf.mxu0
        %v744 = vadd.f32 %v685, %v743
        %v745 = vpop.f32.mrf.mxu0
        %v746 = vadd.f32 %v685, %v745
        %747 = vmatmul.bf16.gmra.mxu0 %v660
        %v748 = vpop.f32.mrf.mxu0
        %v749 = vadd.f32 %v685, %v748
        %v750 = vpop.f32.mrf.mxu0
        %v751 = vadd.f32 %v685, %v750
        %752 = vmatmul.bf16.gmra.mxu0 %v661
        %v753 = vpop.f32.mrf.mxu0
        %v754 = vadd.f32 %v685, %v753
        %v755 = vpop.f32.mrf.mxu0
        %v756 = vadd.f32 %v685, %v755
        %757 = vmatmul.bf16.gmra.mxu0 %v662
        %v758 = vpop.f32.mrf.mxu0
        %v759 = vadd.f32 %v685, %v758
        %v760 = vpop.f32.mrf.mxu0
        %v761 = vadd.f32 %v685, %v760
        %762 = vmatmul.bf16.gmra.mxu0 %v663
        %v763 = vpop.f32.mrf.mxu0
        %v764 = vadd.f32 %v685, %v763
        %v765 = vpop.f32.mrf.mxu0
        %v766 = vadd.f32 %v685, %v765
        %767 = vmatmul.bf16.gmra.mxu0 %v664
        %v768 = vpop.f32.mrf.mxu0
        %v769 = vadd.f32 %v685, %v768
        %v770 = vpop.f32.mrf.mxu0
        %v771 = vadd.f32 %v685, %v770
        %772 = vmatmul.bf16.gmra.mxu0 %v665
        %v773 = vpop.f32.mrf.mxu0
        %v774 = vadd.f32 %v685, %v773
        %v775 = vpop.f32.mrf.mxu0
        %v776 = vadd.f32 %v685, %v775
        %777 = vmatmul.bf16.gmra.mxu0 %v666
        %v778 = vpop.f32.mrf.mxu0
        %v779 = vadd.f32 %v685, %v778
        %v780 = vpop.f32.mrf.mxu0
        %v781 = vadd.f32 %v685, %v780
        %782 = vdwg.mxu0
        %v783 = vmax.f32 %v744, 0.0
        %v784 = vmax.f32 %v746, 0.0
        %v785 = vmax.f32 %v749, 0.0
        %v786 = vmax.f32 %v751, 0.0
        %v787 = vmax.f32 %v754, 0.0
        %v788 = vmax.f32 %v756, 0.0
        %v789 = vmax.f32 %v759, 0.0
        %v790 = vmax.f32 %v761, 0.0
        %v791 = vmax.f32 %v764, 0.0
        %v792 = vmax.f32 %v766, 0.0
        %v793 = vmax.f32 %v769, 0.0
        %v794 = vmax.f32 %v771, 0.0
        %v795 = vmax.f32 %v774, 0.0
        %v796 = vmax.f32 %v776, 0.0
        %v797 = vmax.f32 %v779, 0.0
        %v798 = vmax.f32 %v781, 0.0
        %v799 = vpack.c.bf16 %v784, %v783
        %v800 = vpack.c.bf16 %v786, %v785
        %v801 = vpack.c.bf16 %v788, %v787
        %v802 = vpack.c.bf16 %v790, %v789
        %v803 = vpack.c.bf16 %v792, %v791
        %v804 = vpack.c.bf16 %v794, %v793
        %v805 = vpack.c.bf16 %v796, %v795
        %v806 = vpack.c.bf16 %v798, %v797
        %s807 = scalar_lea.vmem [#allocation5], 256
        %v808 = vld [vmem:[%s807] sm:$0xf]
        %v809 = vld [vmem:[%s807 + $0x4] sm:$0xf]
        %v810 = vld [vmem:[%s807 + $0x8] sm:$0xf]
        %v811 = vld [vmem:[%s807 + $0xc] sm:$0xf]
        %v812 = vld [vmem:[%s807 + $0x10] sm:$0xf]
        %v813 = vld [vmem:[%s807 + $0x14] sm:$0xf]
        %v814 = vld [vmem:[%s807 + $0x18] sm:$0xf]
        %v815 = vld [vmem:[%s807 + $0x1c] sm:$0xf]
        %v816 = vld [vmem:[%s807 + $0x20] sm:$0xf]
        %v817 = vld [vmem:[%s807 + $0x24] sm:$0xf]
        %v818 = vld [vmem:[%s807 + $0x28] sm:$0xf]
        %v819 = vld [vmem:[%s807 + $0x2c] sm:$0xf]
        %v820 = vld [vmem:[%s807 + $0x30] sm:$0xf]
        %v821 = vld [vmem:[%s807 + $0x34] sm:$0xf]
        %v822 = vld [vmem:[%s807 + $0x38] sm:$0xf]
        %v823 = vld [vmem:[%s807 + $0x3c] sm:$0xf]
        %v824 = vld [vmem:[#allocation7 + $0x4] sm:$0x1]
        %v825 = vperm.slane %v824, 0
        %v842 = vunpack.c.l.b16 %v808
        %v843 = vunpack.c.l.b16 %v809
        %v844 = vunpack.c.l.b16 %v810
        %v845 = vunpack.c.l.b16 %v811
        %v846 = vunpack.c.l.b16 %v812
        %v847 = vunpack.c.l.b16 %v813
        %v848 = vunpack.c.l.b16 %v814
        %v849 = vunpack.c.l.b16 %v815
        %v850 = vunpack.c.l.b16 %v816
        %v851 = vunpack.c.l.b16 %v817
        %v852 = vunpack.c.l.b16 %v818
        %v853 = vunpack.c.l.b16 %v819
        %v854 = vunpack.c.l.b16 %v820
        %v855 = vunpack.c.l.b16 %v821
        %v856 = vunpack.c.l.b16 %v822
        %v857 = vunpack.c.l.b16 %v823
        %v858 = vpack.c.b16 %v843, %v842
        %v859 = vpack.c.b16 %v845, %v844
        %v860 = vpack.c.b16 %v847, %v846
        %v861 = vpack.c.b16 %v849, %v848
        %v862 = vpack.c.b16 %v851, %v850
        %v863 = vpack.c.b16 %v853, %v852
        %v864 = vpack.c.b16 %v855, %v854
        %v865 = vpack.c.b16 %v857, %v856
        %874 = vmatpush.bf16.msra.mxu0 %v865
        %875 = vmatpush.bf16.msra.mxu0 %v864
        %876 = vmatpush.bf16.msra.mxu0 %v863
        %877 = vmatpush.bf16.msra.mxu0 %v862
        %878 = vmatpush.bf16.msra.mxu0 %v861
        %879 = vmatpush.bf16.msra.mxu0 %v860
        %880 = vmatpush.bf16.msra.mxu0 %v859
        %881 = vmatpush.bf16.msra.mxu0 %v858
        %882 = vmatmul.bf16.gmra.mxu0 %v799
        %v883 = vpop.f32.mrf.mxu0
        %v884 = vadd.f32 %v825, %v883
        %v885 = vpop.f32.mrf.mxu0
        %v886 = vadd.f32 %v825, %v885
        %887 = vmatmul.bf16.gmra.mxu0 %v800
        %v888 = vpop.f32.mrf.mxu0
        %v889 = vadd.f32 %v825, %v888
        %v890 = vpop.f32.mrf.mxu0
        %v891 = vadd.f32 %v825, %v890
        %892 = vmatmul.bf16.gmra.mxu0 %v801
        %v893 = vpop.f32.mrf.mxu0
        %v894 = vadd.f32 %v825, %v893
        %v895 = vpop.f32.mrf.mxu0
        %v896 = vadd.f32 %v825, %v895
        %897 = vmatmul.bf16.gmra.mxu0 %v802
        %v898 = vpop.f32.mrf.mxu0
        %v899 = vadd.f32 %v825, %v898
        %v900 = vpop.f32.mrf.mxu0
        %v901 = vadd.f32 %v825, %v900
        %902 = vmatmul.bf16.gmra.mxu0 %v803
        %v903 = vpop.f32.mrf.mxu0
        %v904 = vadd.f32 %v825, %v903
        %v905 = vpop.f32.mrf.mxu0
        %v906 = vadd.f32 %v825, %v905
        %907 = vmatmul.bf16.gmra.mxu0 %v804
        %v908 = vpop.f32.mrf.mxu0
        %v909 = vadd.f32 %v825, %v908
        %v910 = vpop.f32.mrf.mxu0
        %v911 = vadd.f32 %v825, %v910
        %912 = vmatmul.bf16.gmra.mxu0 %v805
        %v913 = vpop.f32.mrf.mxu0
        %v914 = vadd.f32 %v825, %v913
        %v915 = vpop.f32.mrf.mxu0
        %v916 = vadd.f32 %v825, %v915
        %917 = vmatmul.bf16.gmra.mxu0 %v806
        %v918 = vpop.f32.mrf.mxu0
        %v919 = vadd.f32 %v825, %v918
        %v920 = vpop.f32.mrf.mxu0
        %v921 = vadd.f32 %v825, %v920
        %922 = vdwg.mxu0
        %923 = vst [vmem:[%s221] sm:$0xff] %v884
        %924 = vst [vmem:[%s221 + $0x8] sm:$0xff] %v886
        %925 = vst [vmem:[%s221 + $0x10] sm:$0xff] %v889
        %926 = vst [vmem:[%s221 + $0x18] sm:$0xff] %v891
        %927 = vst [vmem:[%s221 + $0x20] sm:$0xff] %v894
        %928 = vst [vmem:[%s221 + $0x28] sm:$0xff] %v896
        %929 = vst [vmem:[%s221 + $0x30] sm:$0xff] %v899
        %930 = vst [vmem:[%s221 + $0x38] sm:$0xff] %v901
        %931 = vst [vmem:[%s221 + $0x40] sm:$0xff] %v904
        %932 = vst [vmem:[%s221 + $0x48] sm:$0xff] %v906
        %933 = vst [vmem:[%s221 + $0x50] sm:$0xff] %v909
        %934 = vst [vmem:[%s221 + $0x58] sm:$0xff] %v911
        %935 = vst [vmem:[%s221 + $0x60] sm:$0xff] %v914
        %936 = vst [vmem:[%s221 + $0x68] sm:$0xff] %v916
        %937 = vst [vmem:[%s221 + $0x70] sm:$0xff] %v919
        %938 = vst [vmem:[%s221 + $0x78] sm:$0xff] %v921
        %s939 = sand.u32 %s97, 1
        %s940 = scalar_lea.sflag [#allocation4], %s939
        %s941 = sand.u32 %s97, 1
        %s942 = smul.addr %s941, 128
        %s943 = scalar_lea.vmem [#allocation8], %s942
        // Predicated region
        $region45: #{tpu_custom_call.1} parent=31 // pred_check
          %p944 = pneg %p107
        $region46: #{tpu_custom_call.1} parent=31 // pred_check_branch
          %946 = sbr.rel (%p944) target = $region48
        $region47: #{tpu_custom_call.1} parent=31 // pred_region
          %s947 = smul.u32 16, %s21
          %949 = vsyncadd %s940, 0
          %s950 = smul.addr %s947, 8
          %s951 = scalar_lea.hbm %s3, %s950
          %s952 = sshll.u32 %s943, 4
          %s953 = int_to_ptr.vmem [resolvable:$true] %s952
          %s954 = sshll.u32 %s951, 4
          %s955 = int_to_ptr.hbm [resolvable:$true] %s954
          %960 = dma.vmem_to_hbm [thread:$0]  %s953, 2048, %s955, %s940, 128, 128, 8
        $region48: #{tpu_custom_call.1} parent=31 // pred_fallthru
          _
      $region32: #{tpu_custom_call.1} parent=5 // pred_fallthru
        _
      %p961 = scmp.le.s32.totalorder 2, %s16
      // Predicated region
      $region49: #{tpu_custom_call.1} parent=5 // pred_check
        %p962 = pneg %p961
      $region50: #{tpu_custom_call.1} parent=5 // pred_check_branch
        %964 = sbr.rel (%p962) target = $region52
      $region51: #{tpu_custom_call.1} parent=5 // pred_region
        %s965 = ssub.s32 %s16, 2
        // Predicated region
        $region53: #{tpu_custom_call.1} parent=51 // pred_check
          %p966 = pneg %p113
        $region54: #{tpu_custom_call.1} parent=51 // pred_check_branch
          %968 = sbr.rel (%p966) target = $region56
        $region55: #{tpu_custom_call.1} parent=51 // pred_region
          %s969 = sand.u32 %s98, 1
          %s970 = scalar_lea.sflag [#allocation4], %s969
          %s971 = sand.u32 %s98, 1
          %s972 = smul.addr %s971, 128
          %s973 = scalar_lea.vmem [#allocation8], %s972
          %975 = dma.done %s970, 2048
        $region56: #{tpu_custom_call.1} parent=51 // pred_fallthru
          _
      $region52: #{tpu_custom_call.1} parent=5 // pred_fallthru
        _
    $region6: #{tpu_custom_call.1} parent=1 // loop_footer
      %s20 = sadd.s32 1, %s16
    $region7: #{tpu_custom_call.1} parent=1 // loop_footer_branch
      %15 = sbr.rel target = $region3
    $region8: #{tpu_custom_call.1} parent=1 // loop_exit
      _
    %976 = vsyncpa [#allocation3], 1
    %s977 = scalar_lea.sflag [#allocation3], 1
    %978 = vsyncpa %s977, 1
    %979 = vsyncpa [#allocation6], 1
    %980 = vsyncpa [#allocation4], 1
    %s981 = scalar_lea.sflag [#allocation4], 1
    %982 = vsyncpa %s981, 1

</llo_original>
